<compile_context>
chip_gen: v6e
topology: v6e:2x2x1
jax: 0.10.0
libtpu: 0.0.40
codegen_flags: <defaults>
</compile_context>

<pallas_src>
import jax
import jax.numpy as jnp
from jax.experimental import pallas as pl
from jax.experimental.pallas import tpu as pltpu

_EPS = 1e-4


def _density_kernel(x_ref, rep_mat_ref, tile_mat_ref, out_ref):
    """out[r, i*D + j] = x[r, i] * x[r, j] / (x[r,:] . x[r,:] + eps), lane-dense."""
    x = x_ref[...]                                             # (R, D)
    denom = jnp.sum(x * x, axis=-1, keepdims=True) + _EPS      # (R, 1)
    inv = pl.reciprocal(denom)                                 # exact, per row
    xs = x * inv                                               # (R, D)
    # One-hot expansion matmuls produce the lane-dense factors directly:
    #   rep[r, i*D+j] = xs[r, i]      til[r, i*D+j] = x[r, j]
    rep = jnp.dot(xs, rep_mat_ref[...],
                  preferred_element_type=jnp.float32,
                  precision=jax.lax.Precision.HIGHEST)         # (R, D*D)
    til = jnp.dot(x, tile_mat_ref[...],
                  preferred_element_type=jnp.float32,
                  precision=jax.lax.Precision.HIGHEST)         # (R, D*D)
    out_ref[...] = (rep * til).astype(out_ref.dtype)


def density_layer(x, *, block_rows=None):
    """x: (B, L, D) float32 -> (B, L, D, D), matching DensityLayer.forward."""
    B, L, D = x.shape
    N = B * L
    DD = D * D

    if block_rows is None:
        # ~1 MiB output tiles for real N (>=512 rows hits ~85% of HBM roofline
        # and gives many grid steps for megacore); one padded block for toy N.
        block_rows = 1024 if N >= 1024 else N
    block_rows = max(8, (block_rows + 7) // 8 * 8)             # sublane align
    n_pad = (-N) % block_rows
    n_total = N + n_pad

    x2 = x.reshape(N, D)
    if n_pad:
        x2 = jnp.concatenate([x2, jnp.zeros((n_pad, D), x.dtype)], axis=0)

    # One-hot expansion matrices; small (D, D*D) constants, resident in VMEM
    # across grid steps (index_map always returns block (0, 0)).
    col = jnp.arange(DD)
    row = jnp.arange(D)[:, None]
    rep_mat = (col // D == row).astype(x.dtype)                # (D, D*D)
    tile_mat = (col % D == row).astype(x.dtype)                # (D, D*D)

    out = pl.pallas_call(
        _density_kernel,
        out_shape=jax.ShapeDtypeStruct((n_total, DD), x.dtype),
        grid=(n_total // block_rows,),
        in_specs=[
            pl.BlockSpec((block_rows, D), lambda i: (i, 0)),
            pl.BlockSpec((D, DD), lambda i: (0, 0)),
            pl.BlockSpec((D, DD), lambda i: (0, 0)),
        ],
        out_specs=pl.BlockSpec((block_rows, DD), lambda i: (i, 0)),
        compiler_params=pltpu.CompilerParams(
            dimension_semantics=("parallel",)),
    )(x2, rep_mat, tile_mat)

    return out[:N].reshape(B, L, D, D)


@jax.jit
def density_forward(x):
    # TODO(synk): the module's nn.Parameter W is initialized but never used in
    # forward(); nothing to port for it.
    return density_layer(x)


def reference(x):
    """Pure-JAX reference matching the PyTorch forward (broadcast, no matmul)."""
    denom = jnp.sum(x * x, axis=-1)[..., None, None] + _EPS
    return (x[..., :, None] * x[..., None, :]) / denom


if __name__ == "__main__":
    # DensityLayer(batch_size=2, sen_len=8, word_dim=16): x is (B, L, D).
    B, L, D = 2, 8, 16
    key = jax.random.PRNGKey(0)
    x = jax.random.normal(key, (B, L, D), jnp.float32)

    out = density_forward(x)
    out = jax.block_until_ready(out)

    ref = reference(x)
    assert out.shape == (B, L, D, D)
    err = float(jnp.max(jnp.abs(out - ref)))
    assert jnp.allclose(out, ref, atol=1e-5, rtol=1e-5), err
    print("KERNEL_OK")
</pallas_src>

<mosaic_0001>
module attributes {stable_mosaic.version = 11 : i64} {
  func.func @_density_kernel(%arg0: i32, %arg1: memref<16x16xf32, #tpu.memory_space<vmem>>, %arg2: memref<16x256xf32, #tpu.memory_space<vmem>>, %arg3: memref<16x256xf32, #tpu.memory_space<vmem>>, %arg4: memref<16x256xf32, #tpu.memory_space<vmem>>) attributes {dimension_semantics = [#tpu.dimension_semantics<parallel>], iteration_bounds = array<i64: 1>, scalar_prefetch = 0 : i64, scratch_operands = 0 : i64, tpu.core_type = #tpu.core_type<tc>, window_params = [{transform_indices = @transform_0, window_bounds = array<i64: 16, 16>}, {pipeline_mode = #tpu.pipeline_mode<synchronous>, transform_indices = @transform_1, window_bounds = array<i64: 16, 256>}, {pipeline_mode = #tpu.pipeline_mode<synchronous>, transform_indices = @transform_2, window_bounds = array<i64: 16, 256>}, {transform_indices = @transform_3, window_bounds = array<i64: 16, 256>}]} {
    %c0 = arith.constant 0 : index
    %c0_0 = arith.constant 0 : index
    %0 = vector.load %arg1[%c0, %c0_0] : memref<16x16xf32, #tpu.memory_space<vmem>>, vector<16x16xf32>
    %1 = arith.mulf %0, %0 : vector<16x16xf32>
    %cst = arith.constant dense<0.000000e+00> : vector<16xf32>
    %2 = vector.multi_reduction <add>, %1, %cst [1] : vector<16x16xf32> to vector<16xf32>
    %3 = vector.shape_cast %2 : vector<16xf32> to vector<16x1xf32>
    %cst_1 = arith.constant 9.99999974E-5 : f32
    %4 = vector.broadcast %cst_1 : f32 to vector<16x1xf32>
    %5 = arith.addf %3, %4 : vector<16x1xf32>
    %6 = tpu.reciprocal %5 : vector<16x1xf32> -> vector<16x1xf32>
    %7 = vector.broadcast %6 : vector<16x1xf32> to vector<16x16xf32>
    %8 = arith.mulf %0, %7 : vector<16x16xf32>
    %c0_2 = arith.constant 0 : index
    %c0_3 = arith.constant 0 : index
    %9 = vector.load %arg2[%c0_2, %c0_3] : memref<16x256xf32, #tpu.memory_space<vmem>>, vector<16x256xf32>
    %cst_4 = arith.constant dense<0.000000e+00> : vector<16x256xf32>
    %10 = tpu.matmul %8, %9, %cst_4 {dimension_numbers = #tpu.dot_dimension_numbers<[1], [0], [0], [1], [0, 0, 1, 1], [], []>, precision = #tpu.contract_precision<fp32>} : vector<16x16xf32>, vector<16x256xf32>, vector<16x256xf32> -> vector<16x256xf32>
    %c0_5 = arith.constant 0 : index
    %c0_6 = arith.constant 0 : index
    %11 = vector.load %arg3[%c0_5, %c0_6] : memref<16x256xf32, #tpu.memory_space<vmem>>, vector<16x256xf32>
    %cst_7 = arith.constant dense<0.000000e+00> : vector<16x256xf32>
    %12 = tpu.matmul %0, %11, %cst_7 {dimension_numbers = #tpu.dot_dimension_numbers<[1], [0], [0], [1], [0, 0, 1, 1], [], []>, precision = #tpu.contract_precision<fp32>} : vector<16x16xf32>, vector<16x256xf32>, vector<16x256xf32> -> vector<16x256xf32>
    %13 = arith.mulf %10, %12 : vector<16x256xf32>
    %c0_8 = arith.constant 0 : index
    %c0_9 = arith.constant 0 : index
    %14 = vector.load %arg4[%c0_8, %c0_9] : memref<16x256xf32, #tpu.memory_space<vmem>>, vector<16x256xf32>
    tpu.vector_store %arg4[%c0_8, %c0_9], %13 {strides = array<i32>} : memref<16x256xf32, #tpu.memory_space<vmem>>, vector<16x256xf32>,
    return
  }
  func.func @transform_0(%arg0: i32) -> (i32, i32) {
    %c0_i32 = arith.constant 0 : i32
    %c0_i32_0 = arith.constant 0 : i32
    return %arg0, %c0_i32 : i32, i32
  }
  func.func @transform_1(%arg0: i32) -> (i32, i32) {
    %c0_i32 = arith.constant 0 : i32
    %c0_i32_0 = arith.constant 0 : i32
    %c0_i32_1 = arith.constant 0 : i32
    return %c0_i32, %c0_i32_0 : i32, i32
  }
  func.func @transform_2(%arg0: i32) -> (i32, i32) {
    %c0_i32 = arith.constant 0 : i32
    %c0_i32_0 = arith.constant 0 : i32
    %c0_i32_1 = arith.constant 0 : i32
    return %c0_i32, %c0_i32_0 : i32, i32
  }
  func.func @transform_3(%arg0: i32) -> (i32, i32) {
    %c0_i32 = arith.constant 0 : i32
    %c0_i32_0 = arith.constant 0 : i32
    return %arg0, %c0_i32 : i32, i32
  }
}

</mosaic_0001>

<llo_original>
// kernel: density_forward.1
$region0: #{density_forward.1}
  #allocation0 [shape = 'u32[]', space=smem, size = 0x4, offset = 0x4, fixed_abs, tag = 'smem constant byte address 0x4 - core index']
  #allocation1 [shape = 'u32[144,128]{1,0:T(1,128)}', space=vmem, size = 0x12000, scoped, tag = 'internal scratch']
  %s0 = inlined_call_operand.vmem [shape: f32[16,16], index: 0, kind: input, shape index: {}]
  %s1 = inlined_call_operand.vmem [shape: f32[16,256], index: 1, kind: input, shape index: {}]
  %s2 = inlined_call_operand.vmem [shape: f32[16,256], index: 2, kind: input, shape index: {}]
  %s3 = inlined_call_operand.vmem [shape: f32[16,256], index: 3, kind: output, shape index: {}]
  %s4 = sld [smem:[#allocation0]]
  $region22: #{density_forward.1} parent=0
    _
  %s6 = ssub.s32 1, %s4
  %s7 = scalar_select 0, %s6, %s4
  // Predicated region
  $region2: #{density_forward.1} parent=0 // pred_check
    _
  $region3: #{density_forward.1} parent=0 // pred_check_branch
    %9 = sbr.rel (0) target = $region5
  $region4: #{density_forward.1} parent=0 // pred_region
    _
  $region5: #{density_forward.1} parent=0 // pred_fallthru
    _
  // Predicated region
  $region6: #{density_forward.1} parent=0 // pred_check
    _
  $region7: #{density_forward.1} parent=0 // pred_check_branch
    %11 = sbr.rel (0) target = $region9
  $region8: #{density_forward.1} parent=0 // pred_region
    _
  $region9: #{density_forward.1} parent=0 // pred_fallthru
    _
  // Predicated region
  $region10: #{density_forward.1} parent=0 // pred_check
    _
  $region11: #{density_forward.1} parent=0 // pred_check_branch
    %13 = sbr.rel (0) target = $region13
  $region12: #{density_forward.1} parent=0 // pred_region
    _
  $region13: #{density_forward.1} parent=0 // pred_fallthru
    _
  %v14 = vld [vmem:[%s0] sm:$0xff]
  %v15 = vld [vmem:[%s0 + $0x8] sm:$0xff]
  %v16 = vmul.f32 %v14, %v14
  %v17 = vmul.f32 %v15, %v15
  %vm18 = vcmask 130048
  %v19 = vsel %vm18, %v16, 0.0
  %20 = vadd.xlane.f32.xlu0 %v19
  %v21 = vpop.xlane.xlu0 %20
  %v22 = vsel %vm18, %v17, 0.0
  %23 = vadd.xlane.f32.xlu0 %v22
  %v24 = vpop.xlane.xlu0 %23
  %v25 = vadd.f32 %v21, 0.0001
  %v26 = vadd.f32 %v24, 0.0001
  %v27 = vrcp.pop %v25
  %v28 = vrcp.pop %v26
  %v29 = vmul.f32 %v14, %v27
  %v30 = vmul.f32 %v15, %v28
  %v31 = vld [vmem:[%s1] sm:$0xff]
  %v32 = vld [vmem:[%s1 + $0x8] sm:$0xff]
  %v33 = vld [vmem:[%s1 + $0x10] sm:$0xff]
  %v34 = vld [vmem:[%s1 + $0x18] sm:$0xff]
  %v36 = vsel %vm18, %v29, 0
  %v39 = vsel %vm18, %v30, 0
  %41 = vmatprep.subr.mxu0 0.0
  %42 = vmatpush1.msra.mxu0 0.0
  %43 = vmatprep.subr.mxu0 0.0
  %44 = vmatpush1.msra.mxu0 0.0
  %45 = vmatprep.subr.mxu0 0.0
  %46 = vmatpush1.msra.mxu0 0.0
  %47 = vmatprep.subr.mxu0 0.0
  %48 = vmatpush1.msra.mxu0 0.0
  %49 = vmatprep.subr.mxu0 0.0
  %50 = vmatpush1.msra.mxu0 0.0
  %51 = vmatprep.subr.mxu0 0.0
  %52 = vmatpush1.msra.mxu0 0.0
  %53 = vmatprep.subr.mxu0 0.0
  %54 = vmatpush1.msra.mxu0 0.0
  %55 = vmatprep.subr.mxu0 0.0
  %56 = vmatpush1.msra.mxu0 0.0
  %57 = vmatprep.subr.mxu0 0.0
  %58 = vmatpush1.msra.mxu0 0.0
  %59 = vmatprep.subr.mxu0 0.0
  %60 = vmatpush1.msra.mxu0 0.0
  %61 = vmatprep.subr.mxu0 0.0
  %62 = vmatpush1.msra.mxu0 0.0
  %63 = vmatprep.subr.mxu0 0.0
  %64 = vmatpush1.msra.mxu0 0.0
  %65 = vmatprep.subr.mxu0 0.0
  %66 = vmatpush1.msra.mxu0 0.0
  %67 = vmatprep.subr.mxu0 0.0
  %68 = vmatpush1.msra.mxu0 0.0
  %v69 = vand.u32 %v34, 4294901760
  %70 = vmatprep.subr.mxu0 %v69
  %v71 = vand.u32 %v33, 4294901760
  %72 = vmatpush1.msra.mxu0 %v71
  %v73 = vand.u32 %v32, 4294901760
  %74 = vmatprep.subr.mxu0 %v73
  %v75 = vand.u32 %v31, 4294901760
  %76 = vmatpush1.msra.mxu0 %v75
  %77 = vmatprep.subr.mxu0 0.0
  %78 = vmatpush2.msra.mxu0 0.0
  %79 = vmatprep.subr.mxu0 0.0
  %80 = vmatpush2.msra.mxu0 0.0
  %81 = vmatprep.subr.mxu0 0.0
  %82 = vmatpush2.msra.mxu0 0.0
  %83 = vmatprep.subr.mxu0 0.0
  %84 = vmatpush2.msra.mxu0 0.0
  %85 = vmatprep.subr.mxu0 0.0
  %86 = vmatpush2.msra.mxu0 0.0
  %87 = vmatprep.subr.mxu0 0.0
  %88 = vmatpush2.msra.mxu0 0.0
  %89 = vmatprep.subr.mxu0 0.0
  %90 = vmatpush2.msra.mxu0 0.0
  %91 = vmatprep.subr.mxu0 0.0
  %92 = vmatpush2.msra.mxu0 0.0
  %93 = vmatprep.subr.mxu0 0.0
  %94 = vmatpush2.msra.mxu0 0.0
  %95 = vmatprep.subr.mxu0 0.0
  %96 = vmatpush2.msra.mxu0 0.0
  %97 = vmatprep.subr.mxu0 0.0
  %98 = vmatpush2.msra.mxu0 0.0
  %99 = vmatprep.subr.mxu0 0.0
  %100 = vmatpush2.msra.mxu0 0.0
  %101 = vmatprep.subr.mxu0 0.0
  %102 = vmatpush2.msra.mxu0 0.0
  %103 = vmatprep.subr.mxu0 0.0
  %104 = vmatpush2.msra.mxu0 0.0
  %105 = vmatprep.subr.mxu0 0.0
  %106 = vmatpush2.msra.mxu0 0.0
  %107 = vmatprep.subr.mxu0 0.0
  %108 = vmatpush2.msra.mxu0 0.0
  %109 = vmatprep.mubr.f32.mxu0 0.0
  %v110 = vand.u32 %v36, 4294901760
  %v111 = vsub.f32 %v36, %v110
  %v112 = vand.u32 %v111, 4294901760
  %v113 = vsub.f32 %v111, %v112
  %v114 = vand.u32 %v113, 4294901760
  %115 = vmatmul.mubr.f32.gmra.mxu0 %v114
  %v116 = vpop.f32.mrf.mxu0
  %v117 = vadd.f32 0.0, %v116
  %v118 = vpop.f32.mrf.mxu0
  %v119 = vadd.f32 0.0, %v118
  %120 = vmatprep.mubr.f32.mxu0 0.0
  %v121 = vand.u32 %v39, 4294901760
  %v122 = vsub.f32 %v39, %v121
  %v123 = vand.u32 %v122, 4294901760
  %v124 = vsub.f32 %v122, %v123
  %v125 = vand.u32 %v124, 4294901760
  %126 = vmatmul.mubr.f32.gmra.mxu0 %v125
  %v127 = vpop.f32.mrf.mxu0
  %v128 = vadd.f32 0.0, %v127
  %v129 = vpop.f32.mrf.mxu0
  %v130 = vadd.f32 0.0, %v129
  %131 = vdwg.mxu0
  %132 = vmatprep.subr.mxu0 0.0
  %133 = vmatpush1.msra.mxu0 0.0
  %134 = vmatprep.subr.mxu0 0.0
  %135 = vmatpush1.msra.mxu0 0.0
  %136 = vmatprep.subr.mxu0 0.0
  %137 = vmatpush1.msra.mxu0 0.0
  %138 = vmatprep.subr.mxu0 0.0
  %139 = vmatpush1.msra.mxu0 0.0
  %140 = vmatprep.subr.mxu0 0.0
  %141 = vmatpush1.msra.mxu0 0.0
  %142 = vmatprep.subr.mxu0 0.0
  %143 = vmatpush1.msra.mxu0 0.0
  %144 = vmatprep.subr.mxu0 0.0
  %145 = vmatpush1.msra.mxu0 0.0
  %146 = vmatprep.subr.mxu0 0.0
  %147 = vmatpush1.msra.mxu0 0.0
  %148 = vmatprep.subr.mxu0 0.0
  %149 = vmatpush1.msra.mxu0 0.0
  %150 = vmatprep.subr.mxu0 0.0
  %151 = vmatpush1.msra.mxu0 0.0
  %152 = vmatprep.subr.mxu0 0.0
  %153 = vmatpush1.msra.mxu0 0.0
  %154 = vmatprep.subr.mxu0 0.0
  %155 = vmatpush1.msra.mxu0 0.0
  %156 = vmatprep.subr.mxu0 0.0
  %157 = vmatpush1.msra.mxu0 0.0
  %158 = vmatprep.subr.mxu0 0.0
  %159 = vmatpush1.msra.mxu0 0.0
  %v160 = vand.u32 %v34, 4294901760
  %v161 = vsub.f32 %v34, %v160
  %v162 = vand.u32 %v161, 4294901760
  %v163 = vsub.f32 %v161, %v162
  %v164 = vand.u32 %v163, 4294901760
  %165 = vmatprep.subr.mxu0 %v164
  %v166 = vand.u32 %v33, 4294901760
  %v167 = vsub.f32 %v33, %v166
  %v168 = vand.u32 %v167, 4294901760
  %v169 = vsub.f32 %v167, %v168
  %v170 = vand.u32 %v169, 4294901760
  %171 = vmatpush1.msra.mxu0 %v170
  %v172 = vand.u32 %v32, 4294901760
  %v173 = vsub.f32 %v32, %v172
  %v174 = vand.u32 %v173, 4294901760
  %v175 = vsub.f32 %v173, %v174
  %v176 = vand.u32 %v175, 4294901760
  %177 = vmatprep.subr.mxu0 %v176
  %v178 = vand.u32 %v31, 4294901760
  %v179 = vsub.f32 %v31, %v178
  %v180 = vand.u32 %v179, 4294901760
  %v181 = vsub.f32 %v179, %v180
  %v182 = vand.u32 %v181, 4294901760
  %183 = vmatpush1.msra.mxu0 %v182
  %184 = vmatprep.subr.mxu0 0.0
  %185 = vmatpush2.msra.mxu0 0.0
  %186 = vmatprep.subr.mxu0 0.0
  %187 = vmatpush2.msra.mxu0 0.0
  %188 = vmatprep.subr.mxu0 0.0
  %189 = vmatpush2.msra.mxu0 0.0
  %190 = vmatprep.subr.mxu0 0.0
  %191 = vmatpush2.msra.mxu0 0.0
  %192 = vmatprep.subr.mxu0 0.0
  %193 = vmatpush2.msra.mxu0 0.0
  %194 = vmatprep.subr.mxu0 0.0
  %195 = vmatpush2.msra.mxu0 0.0
  %196 = vmatprep.subr.mxu0 0.0
  %197 = vmatpush2.msra.mxu0 0.0
  %198 = vmatprep.subr.mxu0 0.0
  %199 = vmatpush2.msra.mxu0 0.0
  %200 = vmatprep.subr.mxu0 0.0
  %201 = vmatpush2.msra.mxu0 0.0
  %202 = vmatprep.subr.mxu0 0.0
  %203 = vmatpush2.msra.mxu0 0.0
  %204 = vmatprep.subr.mxu0 0.0
  %205 = vmatpush2.msra.mxu0 0.0
  %206 = vmatprep.subr.mxu0 0.0
  %207 = vmatpush2.msra.mxu0 0.0
  %208 = vmatprep.subr.mxu0 0.0
  %209 = vmatpush2.msra.mxu0 0.0
  %210 = vmatprep.subr.mxu0 0.0
  %211 = vmatpush2.msra.mxu0 0.0
  %212 = vmatprep.subr.mxu0 0.0
  %213 = vmatpush2.msra.mxu0 0.0
  %214 = vmatprep.subr.mxu0 0.0
  %215 = vmatpush2.msra.mxu0 0.0
  %216 = vmatprep.mubr.f32.mxu0 0.0
  %v217 = vand.u32 %v36, 4294901760
  %218 = vmatmul.mubr.f32.gmra.mxu0 %v217
  %v219 = vpop.f32.mrf.mxu0
  %v220 = vadd.f32 %v117, %v219
  %v221 = vpop.f32.mrf.mxu0
  %v222 = vadd.f32 %v119, %v221
  %223 = vmatprep.mubr.f32.mxu0 0.0
  %v224 = vand.u32 %v39, 4294901760
  %225 = vmatmul.mubr.f32.gmra.mxu0 %v224
  %v226 = vpop.f32.mrf.mxu0
  %v227 = vadd.f32 %v128, %v226
  %v228 = vpop.f32.mrf.mxu0
  %v229 = vadd.f32 %v130, %v228
  %230 = vdwg.mxu0
  %231 = vmatprep.subr.mxu0 0.0
  %232 = vmatpush1.msra.mxu0 0.0
  %233 = vmatprep.subr.mxu0 0.0
  %234 = vmatpush1.msra.mxu0 0.0
  %235 = vmatprep.subr.mxu0 0.0
  %236 = vmatpush1.msra.mxu0 0.0
  %237 = vmatprep.subr.mxu0 0.0
  %238 = vmatpush1.msra.mxu0 0.0
  %239 = vmatprep.subr.mxu0 0.0
  %240 = vmatpush1.msra.mxu0 0.0
  %241 = vmatprep.subr.mxu0 0.0
  %242 = vmatpush1.msra.mxu0 0.0
  %243 = vmatprep.subr.mxu0 0.0
  %244 = vmatpush1.msra.mxu0 0.0
  %245 = vmatprep.subr.mxu0 0.0
  %246 = vmatpush1.msra.mxu0 0.0
  %247 = vmatprep.subr.mxu0 0.0
  %248 = vmatpush1.msra.mxu0 0.0
  %249 = vmatprep.subr.mxu0 0.0
  %250 = vmatpush1.msra.mxu0 0.0
  %251 = vmatprep.subr.mxu0 0.0
  %252 = vmatpush1.msra.mxu0 0.0
  %253 = vmatprep.subr.mxu0 0.0
  %254 = vmatpush1.msra.mxu0 0.0
  %255 = vmatprep.subr.mxu0 0.0
  %256 = vmatpush1.msra.mxu0 0.0
  %257 = vmatprep.subr.mxu0 0.0
  %258 = vmatpush1.msra.mxu0 0.0
  %v259 = vand.u32 %v34, 4294901760
  %v260 = vsub.f32 %v34, %v259
  %261 = vmatprep.subr.mxu0 %v260
  %v262 = vand.u32 %v33, 4294901760
  %v263 = vsub.f32 %v33, %v262
  %264 = vmatpush1.msra.mxu0 %v263
  %v265 = vand.u32 %v32, 4294901760
  %v266 = vsub.f32 %v32, %v265
  %267 = vmatprep.subr.mxu0 %v266
  %v268 = vand.u32 %v31, 4294901760
  %v269 = vsub.f32 %v31, %v268
  %270 = vmatpush1.msra.mxu0 %v269
  %271 = vmatprep.subr.mxu0 0.0
  %272 = vmatpush2.msra.mxu0 0.0
  %273 = vmatprep.subr.mxu0 0.0
  %274 = vmatpush2.msra.mxu0 0.0
  %275 = vmatprep.subr.mxu0 0.0
  %276 = vmatpush2.msra.mxu0 0.0
  %277 = vmatprep.subr.mxu0 0.0
  %278 = vmatpush2.msra.mxu0 0.0
  %279 = vmatprep.subr.mxu0 0.0
  %280 = vmatpush2.msra.mxu0 0.0
  %281 = vmatprep.subr.mxu0 0.0
  %282 = vmatpush2.msra.mxu0 0.0
  %283 = vmatprep.subr.mxu0 0.0
  %284 = vmatpush2.msra.mxu0 0.0
  %285 = vmatprep.subr.mxu0 0.0
  %286 = vmatpush2.msra.mxu0 0.0
  %287 = vmatprep.subr.mxu0 0.0
  %288 = vmatpush2.msra.mxu0 0.0
  %289 = vmatprep.subr.mxu0 0.0
  %290 = vmatpush2.msra.mxu0 0.0
  %291 = vmatprep.subr.mxu0 0.0
  %292 = vmatpush2.msra.mxu0 0.0
  %293 = vmatprep.subr.mxu0 0.0
  %294 = vmatpush2.msra.mxu0 0.0
  %295 = vmatprep.subr.mxu0 0.0
  %296 = vmatpush2.msra.mxu0 0.0
  %297 = vmatprep.subr.mxu0 0.0
  %298 = vmatpush2.msra.mxu0 0.0
  %299 = vmatprep.subr.mxu0 0.0
  %300 = vmatpush2.msra.mxu0 0.0
  %301 = vmatprep.subr.mxu0 0.0
  %302 = vmatpush2.msra.mxu0 0.0
  %303 = vmatprep.mubr.f32.mxu0 0.0
  %v304 = vand.u32 %v36, 4294901760
  %v305 = vsub.f32 %v36, %v304
  %306 = vmatmul.mubr.f32.gmra.mxu0 %v305
  %v307 = vpop.f32.mrf.mxu0
  %v308 = vadd.f32 %v220, %v307
  %v309 = vpop.f32.mrf.mxu0
  %v310 = vadd.f32 %v222, %v309
  %311 = vmatprep.mubr.f32.mxu0 0.0
  %v312 = vand.u32 %v39, 4294901760
  %v313 = vsub.f32 %v39, %v312
  %314 = vmatmul.mubr.f32.gmra.mxu0 %v313
  %v315 = vpop.f32.mrf.mxu0
  %v316 = vadd.f32 %v227, %v315
  %v317 = vpop.f32.mrf.mxu0
  %v318 = vadd.f32 %v229, %v317
  %319 = vdwg.mxu0
  %320 = vmatprep.subr.mxu0 0.0
  %321 = vmatpush1.msra.mxu0 0.0
  %322 = vmatprep.subr.mxu0 0.0
  %323 = vmatpush1.msra.mxu0 0.0
  %324 = vmatprep.subr.mxu0 0.0
  %325 = vmatpush1.msra.mxu0 0.0
  %326 = vmatprep.subr.mxu0 0.0
  %327 = vmatpush1.msra.mxu0 0.0
  %328 = vmatprep.subr.mxu0 0.0
  %329 = vmatpush1.msra.mxu0 0.0
  %330 = vmatprep.subr.mxu0 0.0
  %331 = vmatpush1.msra.mxu0 0.0
  %332 = vmatprep.subr.mxu0 0.0
  %333 = vmatpush1.msra.mxu0 0.0
  %334 = vmatprep.subr.mxu0 0.0
  %335 = vmatpush1.msra.mxu0 0.0
  %336 = vmatprep.subr.mxu0 0.0
  %337 = vmatpush1.msra.mxu0 0.0
  %338 = vmatprep.subr.mxu0 0.0
  %339 = vmatpush1.msra.mxu0 0.0
  %340 = vmatprep.subr.mxu0 0.0
  %341 = vmatpush1.msra.mxu0 0.0
  %342 = vmatprep.subr.mxu0 0.0
  %343 = vmatpush1.msra.mxu0 0.0
  %344 = vmatprep.subr.mxu0 0.0
  %345 = vmatpush1.msra.mxu0 0.0
  %346 = vmatprep.subr.mxu0 0.0
  %347 = vmatpush1.msra.mxu0 0.0
  %v348 = vand.u32 %v34, 4294901760
  %349 = vmatprep.subr.mxu0 %v348
  %v350 = vand.u32 %v33, 4294901760
  %351 = vmatpush1.msra.mxu0 %v350
  %v352 = vand.u32 %v32, 4294901760
  %353 = vmatprep.subr.mxu0 %v352
  %v354 = vand.u32 %v31, 4294901760
  %355 = vmatpush1.msra.mxu0 %v354
  %356 = vmatprep.subr.mxu0 0.0
  %357 = vmatpush2.msra.mxu0 0.0
  %358 = vmatprep.subr.mxu0 0.0
  %359 = vmatpush2.msra.mxu0 0.0
  %360 = vmatprep.subr.mxu0 0.0
  %361 = vmatpush2.msra.mxu0 0.0
  %362 = vmatprep.subr.mxu0 0.0
  %363 = vmatpush2.msra.mxu0 0.0
  %364 = vmatprep.subr.mxu0 0.0
  %365 = vmatpush2.msra.mxu0 0.0
  %366 = vmatprep.subr.mxu0 0.0
  %367 = vmatpush2.msra.mxu0 0.0
  %368 = vmatprep.subr.mxu0 0.0
  %369 = vmatpush2.msra.mxu0 0.0
  %370 = vmatprep.subr.mxu0 0.0
  %371 = vmatpush2.msra.mxu0 0.0
  %372 = vmatprep.subr.mxu0 0.0
  %373 = vmatpush2.msra.mxu0 0.0
  %374 = vmatprep.subr.mxu0 0.0
  %375 = vmatpush2.msra.mxu0 0.0
  %376 = vmatprep.subr.mxu0 0.0
  %377 = vmatpush2.msra.mxu0 0.0
  %378 = vmatprep.subr.mxu0 0.0
  %379 = vmatpush2.msra.mxu0 0.0
  %380 = vmatprep.subr.mxu0 0.0
  %381 = vmatpush2.msra.mxu0 0.0
  %382 = vmatprep.subr.mxu0 0.0
  %383 = vmatpush2.msra.mxu0 0.0
  %384 = vmatprep.subr.mxu0 0.0
  %385 = vmatpush2.msra.mxu0 0.0
  %386 = vmatprep.subr.mxu0 0.0
  %387 = vmatpush2.msra.mxu0 0.0
  %388 = vmatprep.mubr.f32.mxu0 0.0
  %v389 = vand.u32 %v36, 4294901760
  %v390 = vsub.f32 %v36, %v389
  %v391 = vand.u32 %v390, 4294901760
  %392 = vmatmul.mubr.f32.gmra.mxu0 %v391
  %v393 = vpop.f32.mrf.mxu0
  %v394 = vadd.f32 %v308, %v393
  %v395 = vpop.f32.mrf.mxu0
  %v396 = vadd.f32 %v310, %v395
  %397 = vmatprep.mubr.f32.mxu0 0.0
  %v398 = vand.u32 %v39, 4294901760
  %v399 = vsub.f32 %v39, %v398
  %v400 = vand.u32 %v399, 4294901760
  %401 = vmatmul.mubr.f32.gmra.mxu0 %v400
  %v402 = vpop.f32.mrf.mxu0
  %v403 = vadd.f32 %v316, %v402
  %v404 = vpop.f32.mrf.mxu0
  %v405 = vadd.f32 %v318, %v404
  %406 = vdwg.mxu0
  %407 = vmatprep.subr.mxu0 0.0
  %408 = vmatpush1.msra.mxu0 0.0
  %409 = vmatprep.subr.mxu0 0.0
  %410 = vmatpush1.msra.mxu0 0.0
  %411 = vmatprep.subr.mxu0 0.0
  %412 = vmatpush1.msra.mxu0 0.0
  %413 = vmatprep.subr.mxu0 0.0
  %414 = vmatpush1.msra.mxu0 0.0
  %415 = vmatprep.subr.mxu0 0.0
  %416 = vmatpush1.msra.mxu0 0.0
  %417 = vmatprep.subr.mxu0 0.0
  %418 = vmatpush1.msra.mxu0 0.0
  %419 = vmatprep.subr.mxu0 0.0
  %420 = vmatpush1.msra.mxu0 0.0
  %421 = vmatprep.subr.mxu0 0.0
  %422 = vmatpush1.msra.mxu0 0.0
  %423 = vmatprep.subr.mxu0 0.0
  %424 = vmatpush1.msra.mxu0 0.0
  %425 = vmatprep.subr.mxu0 0.0
  %426 = vmatpush1.msra.mxu0 0.0
  %427 = vmatprep.subr.mxu0 0.0
  %428 = vmatpush1.msra.mxu0 0.0
  %429 = vmatprep.subr.mxu0 0.0
  %430 = vmatpush1.msra.mxu0 0.0
  %431 = vmatprep.subr.mxu0 0.0
  %432 = vmatpush1.msra.mxu0 0.0
  %433 = vmatprep.subr.mxu0 0.0
  %434 = vmatpush1.msra.mxu0 0.0
  %v435 = vand.u32 %v34, 4294901760
  %v436 = vsub.f32 %v34, %v435
  %v437 = vand.u32 %v436, 4294901760
  %438 = vmatprep.subr.mxu0 %v437
  %v439 = vand.u32 %v33, 4294901760
  %v440 = vsub.f32 %v33, %v439
  %v441 = vand.u32 %v440, 4294901760
  %442 = vmatpush1.msra.mxu0 %v441
  %v443 = vand.u32 %v32, 4294901760
  %v444 = vsub.f32 %v32, %v443
  %v445 = vand.u32 %v444, 4294901760
  %446 = vmatprep.subr.mxu0 %v445
  %v447 = vand.u32 %v31, 4294901760
  %v448 = vsub.f32 %v31, %v447
  %v449 = vand.u32 %v448, 4294901760
  %450 = vmatpush1.msra.mxu0 %v449
  %451 = vmatprep.subr.mxu0 0.0
  %452 = vmatpush2.msra.mxu0 0.0
  %453 = vmatprep.subr.mxu0 0.0
  %454 = vmatpush2.msra.mxu0 0.0
  %455 = vmatprep.subr.mxu0 0.0
  %456 = vmatpush2.msra.mxu0 0.0
  %457 = vmatprep.subr.mxu0 0.0
  %458 = vmatpush2.msra.mxu0 0.0
  %459 = vmatprep.subr.mxu0 0.0
  %460 = vmatpush2.msra.mxu0 0.0
  %461 = vmatprep.subr.mxu0 0.0
  %462 = vmatpush2.msra.mxu0 0.0
  %463 = vmatprep.subr.mxu0 0.0
  %464 = vmatpush2.msra.mxu0 0.0
  %465 = vmatprep.subr.mxu0 0.0
  %466 = vmatpush2.msra.mxu0 0.0
  %467 = vmatprep.subr.mxu0 0.0
  %468 = vmatpush2.msra.mxu0 0.0
  %469 = vmatprep.subr.mxu0 0.0
  %470 = vmatpush2.msra.mxu0 0.0
  %471 = vmatprep.subr.mxu0 0.0
  %472 = vmatpush2.msra.mxu0 0.0
  %473 = vmatprep.subr.mxu0 0.0
  %474 = vmatpush2.msra.mxu0 0.0
  %475 = vmatprep.subr.mxu0 0.0
  %476 = vmatpush2.msra.mxu0 0.0
  %477 = vmatprep.subr.mxu0 0.0
  %478 = vmatpush2.msra.mxu0 0.0
  %479 = vmatprep.subr.mxu0 0.0
  %480 = vmatpush2.msra.mxu0 0.0
  %481 = vmatprep.subr.mxu0 0.0
  %482 = vmatpush2.msra.mxu0 0.0
  %483 = vmatprep.mubr.f32.mxu0 0.0
  %v484 = vand.u32 %v36, 4294901760
  %485 = vmatmul.mubr.f32.gmra.mxu0 %v484
  %v486 = vpop.f32.mrf.mxu0
  %v487 = vadd.f32 %v394, %v486
  %v488 = vpop.f32.mrf.mxu0
  %v489 = vadd.f32 %v396, %v488
  %490 = vmatprep.mubr.f32.mxu0 0.0
  %v491 = vand.u32 %v39, 4294901760
  %492 = vmatmul.mubr.f32.gmra.mxu0 %v491
  %v493 = vpop.f32.mrf.mxu0
  %v494 = vadd.f32 %v403, %v493
  %v495 = vpop.f32.mrf.mxu0
  %v496 = vadd.f32 %v405, %v495
  %497 = vdwg.mxu0
  %498 = vmatprep.subr.mxu0 0.0
  %499 = vmatpush1.msra.mxu0 0.0
  %500 = vmatprep.subr.mxu0 0.0
  %501 = vmatpush1.msra.mxu0 0.0
  %502 = vmatprep.subr.mxu0 0.0
  %503 = vmatpush1.msra.mxu0 0.0
  %504 = vmatprep.subr.mxu0 0.0
  %505 = vmatpush1.msra.mxu0 0.0
  %506 = vmatprep.subr.mxu0 0.0
  %507 = vmatpush1.msra.mxu0 0.0
  %508 = vmatprep.subr.mxu0 0.0
  %509 = vmatpush1.msra.mxu0 0.0
  %510 = vmatprep.subr.mxu0 0.0
  %511 = vmatpush1.msra.mxu0 0.0
  %512 = vmatprep.subr.mxu0 0.0
  %513 = vmatpush1.msra.mxu0 0.0
  %514 = vmatprep.subr.mxu0 0.0
  %515 = vmatpush1.msra.mxu0 0.0
  %516 = vmatprep.subr.mxu0 0.0
  %517 = vmatpush1.msra.mxu0 0.0
  %518 = vmatprep.subr.mxu0 0.0
  %519 = vmatpush1.msra.mxu0 0.0
  %520 = vmatprep.subr.mxu0 0.0
  %521 = vmatpush1.msra.mxu0 0.0
  %522 = vmatprep.subr.mxu0 0.0
  %523 = vmatpush1.msra.mxu0 0.0
  %524 = vmatprep.subr.mxu0 0.0
  %525 = vmatpush1.msra.mxu0 0.0
  %v526 = vand.u32 %v34, 4294901760
  %527 = vmatprep.subr.mxu0 %v526
  %v528 = vand.u32 %v33, 4294901760
  %529 = vmatpush1.msra.mxu0 %v528
  %v530 = vand.u32 %v32, 4294901760
  %531 = vmatprep.subr.mxu0 %v530
  %v532 = vand.u32 %v31, 4294901760
  %533 = vmatpush1.msra.mxu0 %v532
  %534 = vmatprep.subr.mxu0 0.0
  %535 = vmatpush2.msra.mxu0 0.0
  %536 = vmatprep.subr.mxu0 0.0
  %537 = vmatpush2.msra.mxu0 0.0
  %538 = vmatprep.subr.mxu0 0.0
  %539 = vmatpush2.msra.mxu0 0.0
  %540 = vmatprep.subr.mxu0 0.0
  %541 = vmatpush2.msra.mxu0 0.0
  %542 = vmatprep.subr.mxu0 0.0
  %543 = vmatpush2.msra.mxu0 0.0
  %544 = vmatprep.subr.mxu0 0.0
  %545 = vmatpush2.msra.mxu0 0.0
  %546 = vmatprep.subr.mxu0 0.0
  %547 = vmatpush2.msra.mxu0 0.0
  %548 = vmatprep.subr.mxu0 0.0
  %549 = vmatpush2.msra.mxu0 0.0
  %550 = vmatprep.subr.mxu0 0.0
  %551 = vmatpush2.msra.mxu0 0.0
  %552 = vmatprep.subr.mxu0 0.0
  %553 = vmatpush2.msra.mxu0 0.0
  %554 = vmatprep.subr.mxu0 0.0
  %555 = vmatpush2.msra.mxu0 0.0
  %556 = vmatprep.subr.mxu0 0.0
  %557 = vmatpush2.msra.mxu0 0.0
  %558 = vmatprep.subr.mxu0 0.0
  %559 = vmatpush2.msra.mxu0 0.0
  %560 = vmatprep.subr.mxu0 0.0
  %561 = vmatpush2.msra.mxu0 0.0
  %562 = vmatprep.subr.mxu0 0.0
  %563 = vmatpush2.msra.mxu0 0.0
  %564 = vmatprep.subr.mxu0 0.0
  %565 = vmatpush2.msra.mxu0 0.0
  %566 = vmatprep.mubr.f32.mxu0 0.0
  %v567 = vand.u32 %v36, 4294901760
  %568 = vmatmul.mubr.f32.gmra.mxu0 %v567
  %v569 = vpop.f32.mrf.mxu0
  %v570 = vadd.f32 %v487, %v569
  %v571 = vpop.f32.mrf.mxu0
  %v572 = vadd.f32 %v489, %v571
  %573 = vmatprep.mubr.f32.mxu0 0.0
  %v574 = vand.u32 %v39, 4294901760
  %575 = vmatmul.mubr.f32.gmra.mxu0 %v574
  %v576 = vpop.f32.mrf.mxu0
  %v577 = vadd.f32 %v494, %v576
  %v578 = vpop.f32.mrf.mxu0
  %v579 = vadd.f32 %v496, %v578
  %580 = vdwg.mxu0
  %v581 = vld [vmem:[%s2] sm:$0xff]
  %v582 = vld [vmem:[%s2 + $0x8] sm:$0xff]
  %v583 = vld [vmem:[%s2 + $0x10] sm:$0xff]
  %v584 = vld [vmem:[%s2 + $0x18] sm:$0xff]
  %v586 = vsel %vm18, %v14, 0
  %v589 = vsel %vm18, %v15, 0
  %591 = vmatprep.subr.mxu0 0.0
  %592 = vmatpush1.msra.mxu0 0.0
  %593 = vmatprep.subr.mxu0 0.0
  %594 = vmatpush1.msra.mxu0 0.0
  %595 = vmatprep.subr.mxu0 0.0
  %596 = vmatpush1.msra.mxu0 0.0
  %597 = vmatprep.subr.mxu0 0.0
  %598 = vmatpush1.msra.mxu0 0.0
  %599 = vmatprep.subr.mxu0 0.0
  %600 = vmatpush1.msra.mxu0 0.0
  %601 = vmatprep.subr.mxu0 0.0
  %602 = vmatpush1.msra.mxu0 0.0
  %603 = vmatprep.subr.mxu0 0.0
  %604 = vmatpush1.msra.mxu0 0.0
  %605 = vmatprep.subr.mxu0 0.0
  %606 = vmatpush1.msra.mxu0 0.0
  %607 = vmatprep.subr.mxu0 0.0
  %608 = vmatpush1.msra.mxu0 0.0
  %609 = vmatprep.subr.mxu0 0.0
  %610 = vmatpush1.msra.mxu0 0.0
  %611 = vmatprep.subr.mxu0 0.0
  %612 = vmatpush1.msra.mxu0 0.0
  %613 = vmatprep.subr.mxu0 0.0
  %614 = vmatpush1.msra.mxu0 0.0
  %615 = vmatprep.subr.mxu0 0.0
  %616 = vmatpush1.msra.mxu0 0.0
  %617 = vmatprep.subr.mxu0 0.0
  %618 = vmatpush1.msra.mxu0 0.0
  %v619 = vand.u32 %v584, 4294901760
  %620 = vmatprep.subr.mxu0 %v619
  %v621 = vand.u32 %v583, 4294901760
  %622 = vmatpush1.msra.mxu0 %v621
  %v623 = vand.u32 %v582, 4294901760
  %624 = vmatprep.subr.mxu0 %v623
  %v625 = vand.u32 %v581, 4294901760
  %626 = vmatpush1.msra.mxu0 %v625
  %627 = vmatprep.subr.mxu0 0.0
  %628 = vmatpush2.msra.mxu0 0.0
  %629 = vmatprep.subr.mxu0 0.0
  %630 = vmatpush2.msra.mxu0 0.0
  %631 = vmatprep.subr.mxu0 0.0
  %632 = vmatpush2.msra.mxu0 0.0
  %633 = vmatprep.subr.mxu0 0.0
  %634 = vmatpush2.msra.mxu0 0.0
  %635 = vmatprep.subr.mxu0 0.0
  %636 = vmatpush2.msra.mxu0 0.0
  %637 = vmatprep.subr.mxu0 0.0
  %638 = vmatpush2.msra.mxu0 0.0
  %639 = vmatprep.subr.mxu0 0.0
  %640 = vmatpush2.msra.mxu0 0.0
  %641 = vmatprep.subr.mxu0 0.0
  %642 = vmatpush2.msra.mxu0 0.0
  %643 = vmatprep.subr.mxu0 0.0
  %644 = vmatpush2.msra.mxu0 0.0
  %645 = vmatprep.subr.mxu0 0.0
  %646 = vmatpush2.msra.mxu0 0.0
  %647 = vmatprep.subr.mxu0 0.0
  %648 = vmatpush2.msra.mxu0 0.0
  %649 = vmatprep.subr.mxu0 0.0
  %650 = vmatpush2.msra.mxu0 0.0
  %651 = vmatprep.subr.mxu0 0.0
  %652 = vmatpush2.msra.mxu0 0.0
  %653 = vmatprep.subr.mxu0 0.0
  %654 = vmatpush2.msra.mxu0 0.0
  %655 = vmatprep.subr.mxu0 0.0
  %656 = vmatpush2.msra.mxu0 0.0
  %657 = vmatprep.subr.mxu0 0.0
  %658 = vmatpush2.msra.mxu0 0.0
  %659 = vmatprep.mubr.f32.mxu0 0.0
  %v660 = vand.u32 %v586, 4294901760
  %v661 = vsub.f32 %v586, %v660
  %v662 = vand.u32 %v661, 4294901760
  %v663 = vsub.f32 %v661, %v662
  %v664 = vand.u32 %v663, 4294901760
  %665 = vmatmul.mubr.f32.gmra.mxu0 %v664
  %v666 = vpop.f32.mrf.mxu0
  %v667 = vadd.f32 0.0, %v666
  %v668 = vpop.f32.mrf.mxu0
  %v669 = vadd.f32 0.0, %v668
  %670 = vmatprep.mubr.f32.mxu0 0.0
  %v671 = vand.u32 %v589, 4294901760
  %v672 = vsub.f32 %v589, %v671
  %v673 = vand.u32 %v672, 4294901760
  %v674 = vsub.f32 %v672, %v673
  %v675 = vand.u32 %v674, 4294901760
  %676 = vmatmul.mubr.f32.gmra.mxu0 %v675
  %v677 = vpop.f32.mrf.mxu0
  %v678 = vadd.f32 0.0, %v677
  %v679 = vpop.f32.mrf.mxu0
  %v680 = vadd.f32 0.0, %v679
  %681 = vdwg.mxu0
  %682 = vmatprep.subr.mxu0 0.0
  %683 = vmatpush1.msra.mxu0 0.0
  %684 = vmatprep.subr.mxu0 0.0
  %685 = vmatpush1.msra.mxu0 0.0
  %686 = vmatprep.subr.mxu0 0.0
  %687 = vmatpush1.msra.mxu0 0.0
  %688 = vmatprep.subr.mxu0 0.0
  %689 = vmatpush1.msra.mxu0 0.0
  %690 = vmatprep.subr.mxu0 0.0
  %691 = vmatpush1.msra.mxu0 0.0
  %692 = vmatprep.subr.mxu0 0.0
  %693 = vmatpush1.msra.mxu0 0.0
  %694 = vmatprep.subr.mxu0 0.0
  %695 = vmatpush1.msra.mxu0 0.0
  %696 = vmatprep.subr.mxu0 0.0
  %697 = vmatpush1.msra.mxu0 0.0
  %698 = vmatprep.subr.mxu0 0.0
  %699 = vmatpush1.msra.mxu0 0.0
  %700 = vmatprep.subr.mxu0 0.0
  %701 = vmatpush1.msra.mxu0 0.0
  %702 = vmatprep.subr.mxu0 0.0
  %703 = vmatpush1.msra.mxu0 0.0
  %704 = vmatprep.subr.mxu0 0.0
  %705 = vmatpush1.msra.mxu0 0.0
  %706 = vmatprep.subr.mxu0 0.0
  %707 = vmatpush1.msra.mxu0 0.0
  %708 = vmatprep.subr.mxu0 0.0
  %709 = vmatpush1.msra.mxu0 0.0
  %v710 = vand.u32 %v584, 4294901760
  %v711 = vsub.f32 %v584, %v710
  %v712 = vand.u32 %v711, 4294901760
  %v713 = vsub.f32 %v711, %v712
  %v714 = vand.u32 %v713, 4294901760
  %715 = vmatprep.subr.mxu0 %v714
  %v716 = vand.u32 %v583, 4294901760
  %v717 = vsub.f32 %v583, %v716
  %v718 = vand.u32 %v717, 4294901760
  %v719 = vsub.f32 %v717, %v718
  %v720 = vand.u32 %v719, 4294901760
  %721 = vmatpush1.msra.mxu0 %v720
  %v722 = vand.u32 %v582, 4294901760
  %v723 = vsub.f32 %v582, %v722
  %v724 = vand.u32 %v723, 4294901760
  %v725 = vsub.f32 %v723, %v724
  %v726 = vand.u32 %v725, 4294901760
  %727 = vmatprep.subr.mxu0 %v726
  %v728 = vand.u32 %v581, 4294901760
  %v729 = vsub.f32 %v581, %v728
  %v730 = vand.u32 %v729, 4294901760
  %v731 = vsub.f32 %v729, %v730
  %v732 = vand.u32 %v731, 4294901760
  %733 = vmatpush1.msra.mxu0 %v732
  %734 = vmatprep.subr.mxu0 0.0
  %735 = vmatpush2.msra.mxu0 0.0
  %736 = vmatprep.subr.mxu0 0.0
  %737 = vmatpush2.msra.mxu0 0.0
  %738 = vmatprep.subr.mxu0 0.0
  %739 = vmatpush2.msra.mxu0 0.0
  %740 = vmatprep.subr.mxu0 0.0
  %741 = vmatpush2.msra.mxu0 0.0
  %742 = vmatprep.subr.mxu0 0.0
  %743 = vmatpush2.msra.mxu0 0.0
  %744 = vmatprep.subr.mxu0 0.0
  %745 = vmatpush2.msra.mxu0 0.0
  %746 = vmatprep.subr.mxu0 0.0
  %747 = vmatpush2.msra.mxu0 0.0
  %748 = vmatprep.subr.mxu0 0.0
  %749 = vmatpush2.msra.mxu0 0.0
  %750 = vmatprep.subr.mxu0 0.0
  %751 = vmatpush2.msra.mxu0 0.0
  %752 = vmatprep.subr.mxu0 0.0
  %753 = vmatpush2.msra.mxu0 0.0
  %754 = vmatprep.subr.mxu0 0.0
  %755 = vmatpush2.msra.mxu0 0.0
  %756 = vmatprep.subr.mxu0 0.0
  %757 = vmatpush2.msra.mxu0 0.0
  %758 = vmatprep.subr.mxu0 0.0
  %759 = vmatpush2.msra.mxu0 0.0
  %760 = vmatprep.subr.mxu0 0.0
  %761 = vmatpush2.msra.mxu0 0.0
  %762 = vmatprep.subr.mxu0 0.0
  %763 = vmatpush2.msra.mxu0 0.0
  %764 = vmatprep.subr.mxu0 0.0
  %765 = vmatpush2.msra.mxu0 0.0
  %766 = vmatprep.mubr.f32.mxu0 0.0
  %v767 = vand.u32 %v586, 4294901760
  %768 = vmatmul.mubr.f32.gmra.mxu0 %v767
  %v769 = vpop.f32.mrf.mxu0
  %v770 = vadd.f32 %v667, %v769
  %v771 = vpop.f32.mrf.mxu0
  %v772 = vadd.f32 %v669, %v771
  %773 = vmatprep.mubr.f32.mxu0 0.0
  %v774 = vand.u32 %v589, 4294901760
  %775 = vmatmul.mubr.f32.gmra.mxu0 %v774
  %v776 = vpop.f32.mrf.mxu0
  %v777 = vadd.f32 %v678, %v776
  %v778 = vpop.f32.mrf.mxu0
  %v779 = vadd.f32 %v680, %v778
  %780 = vdwg.mxu0
  %781 = vmatprep.subr.mxu0 0.0
  %782 = vmatpush1.msra.mxu0 0.0
  %783 = vmatprep.subr.mxu0 0.0
  %784 = vmatpush1.msra.mxu0 0.0
  %785 = vmatprep.subr.mxu0 0.0
  %786 = vmatpush1.msra.mxu0 0.0
  %787 = vmatprep.subr.mxu0 0.0
  %788 = vmatpush1.msra.mxu0 0.0
  %789 = vmatprep.subr.mxu0 0.0
  %790 = vmatpush1.msra.mxu0 0.0
  %791 = vmatprep.subr.mxu0 0.0
  %792 = vmatpush1.msra.mxu0 0.0
  %793 = vmatprep.subr.mxu0 0.0
  %794 = vmatpush1.msra.mxu0 0.0
  %795 = vmatprep.subr.mxu0 0.0
  %796 = vmatpush1.msra.mxu0 0.0
  %797 = vmatprep.subr.mxu0 0.0
  %798 = vmatpush1.msra.mxu0 0.0
  %799 = vmatprep.subr.mxu0 0.0
  %800 = vmatpush1.msra.mxu0 0.0
  %801 = vmatprep.subr.mxu0 0.0
  %802 = vmatpush1.msra.mxu0 0.0
  %803 = vmatprep.subr.mxu0 0.0
  %804 = vmatpush1.msra.mxu0 0.0
  %805 = vmatprep.subr.mxu0 0.0
  %806 = vmatpush1.msra.mxu0 0.0
  %807 = vmatprep.subr.mxu0 0.0
  %808 = vmatpush1.msra.mxu0 0.0
  %v809 = vand.u32 %v584, 4294901760
  %v810 = vsub.f32 %v584, %v809
  %811 = vmatprep.subr.mxu0 %v810
  %v812 = vand.u32 %v583, 4294901760
  %v813 = vsub.f32 %v583, %v812
  %814 = vmatpush1.msra.mxu0 %v813
  %v815 = vand.u32 %v582, 4294901760
  %v816 = vsub.f32 %v582, %v815
  %817 = vmatprep.subr.mxu0 %v816
  %v818 = vand.u32 %v581, 4294901760
  %v819 = vsub.f32 %v581, %v818
  %820 = vmatpush1.msra.mxu0 %v819
  %821 = vmatprep.subr.mxu0 0.0
  %822 = vmatpush2.msra.mxu0 0.0
  %823 = vmatprep.subr.mxu0 0.0
  %824 = vmatpush2.msra.mxu0 0.0
  %825 = vmatprep.subr.mxu0 0.0
  %826 = vmatpush2.msra.mxu0 0.0
  %827 = vmatprep.subr.mxu0 0.0
  %828 = vmatpush2.msra.mxu0 0.0
  %829 = vmatprep.subr.mxu0 0.0
  %830 = vmatpush2.msra.mxu0 0.0
  %831 = vmatprep.subr.mxu0 0.0
  %832 = vmatpush2.msra.mxu0 0.0
  %833 = vmatprep.subr.mxu0 0.0
  %834 = vmatpush2.msra.mxu0 0.0
  %835 = vmatprep.subr.mxu0 0.0
  %836 = vmatpush2.msra.mxu0 0.0
  %837 = vmatprep.subr.mxu0 0.0
  %838 = vmatpush2.msra.mxu0 0.0
  %839 = vmatprep.subr.mxu0 0.0
  %840 = vmatpush2.msra.mxu0 0.0
  %841 = vmatprep.subr.mxu0 0.0
  %842 = vmatpush2.msra.mxu0 0.0
  %843 = vmatprep.subr.mxu0 0.0
  %844 = vmatpush2.msra.mxu0 0.0
  %845 = vmatprep.subr.mxu0 0.0
  %846 = vmatpush2.msra.mxu0 0.0
  %847 = vmatprep.subr.mxu0 0.0
  %848 = vmatpush2.msra.mxu0 0.0
  %849 = vmatprep.subr.mxu0 0.0
  %850 = vmatpush2.msra.mxu0 0.0
  %851 = vmatprep.subr.mxu0 0.0
  %852 = vmatpush2.msra.mxu0 0.0
  %853 = vmatprep.mubr.f32.mxu0 0.0
  %v854 = vand.u32 %v586, 4294901760
  %v855 = vsub.f32 %v586, %v854
  %856 = vmatmul.mubr.f32.gmra.mxu0 %v855
  %v857 = vpop.f32.mrf.mxu0
  %v858 = vadd.f32 %v770, %v857
  %v859 = vpop.f32.mrf.mxu0
  %v860 = vadd.f32 %v772, %v859
  %861 = vmatprep.mubr.f32.mxu0 0.0
  %v862 = vand.u32 %v589, 4294901760
  %v863 = vsub.f32 %v589, %v862
  %864 = vmatmul.mubr.f32.gmra.mxu0 %v863
  %v865 = vpop.f32.mrf.mxu0
  %v866 = vadd.f32 %v777, %v865
  %v867 = vpop.f32.mrf.mxu0
  %v868 = vadd.f32 %v779, %v867
  %869 = vdwg.mxu0
  %870 = vmatprep.subr.mxu0 0.0
  %871 = vmatpush1.msra.mxu0 0.0
  %872 = vmatprep.subr.mxu0 0.0
  %873 = vmatpush1.msra.mxu0 0.0
  %874 = vmatprep.subr.mxu0 0.0
  %875 = vmatpush1.msra.mxu0 0.0
  %876 = vmatprep.subr.mxu0 0.0
  %877 = vmatpush1.msra.mxu0 0.0
  %878 = vmatprep.subr.mxu0 0.0
  %879 = vmatpush1.msra.mxu0 0.0
  %880 = vmatprep.subr.mxu0 0.0
  %881 = vmatpush1.msra.mxu0 0.0
  %882 = vmatprep.subr.mxu0 0.0
  %883 = vmatpush1.msra.mxu0 0.0
  %884 = vmatprep.subr.mxu0 0.0
  %885 = vmatpush1.msra.mxu0 0.0
  %886 = vmatprep.subr.mxu0 0.0
  %887 = vmatpush1.msra.mxu0 0.0
  %888 = vmatprep.subr.mxu0 0.0
  %889 = vmatpush1.msra.mxu0 0.0
  %890 = vmatprep.subr.mxu0 0.0
  %891 = vmatpush1.msra.mxu0 0.0
  %892 = vmatprep.subr.mxu0 0.0
  %893 = vmatpush1.msra.mxu0 0.0
  %894 = vmatprep.subr.mxu0 0.0
  %895 = vmatpush1.msra.mxu0 0.0
  %896 = vmatprep.subr.mxu0 0.0
  %897 = vmatpush1.msra.mxu0 0.0
  %v898 = vand.u32 %v584, 4294901760
  %899 = vmatprep.subr.mxu0 %v898
  %v900 = vand.u32 %v583, 4294901760
  %901 = vmatpush1.msra.mxu0 %v900
  %v902 = vand.u32 %v582, 4294901760
  %903 = vmatprep.subr.mxu0 %v902
  %v904 = vand.u32 %v581, 4294901760
  %905 = vmatpush1.msra.mxu0 %v904
  %906 = vmatprep.subr.mxu0 0.0
  %907 = vmatpush2.msra.mxu0 0.0
  %908 = vmatprep.subr.mxu0 0.0
  %909 = vmatpush2.msra.mxu0 0.0
  %910 = vmatprep.subr.mxu0 0.0
  %911 = vmatpush2.msra.mxu0 0.0
  %912 = vmatprep.subr.mxu0 0.0
  %913 = vmatpush2.msra.mxu0 0.0
  %914 = vmatprep.subr.mxu0 0.0
  %915 = vmatpush2.msra.mxu0 0.0
  %916 = vmatprep.subr.mxu0 0.0
  %917 = vmatpush2.msra.mxu0 0.0
  %918 = vmatprep.subr.mxu0 0.0
  %919 = vmatpush2.msra.mxu0 0.0
  %920 = vmatprep.subr.mxu0 0.0
  %921 = vmatpush2.msra.mxu0 0.0
  %922 = vmatprep.subr.mxu0 0.0
  %923 = vmatpush2.msra.mxu0 0.0
  %924 = vmatprep.subr.mxu0 0.0
  %925 = vmatpush2.msra.mxu0 0.0
  %926 = vmatprep.subr.mxu0 0.0
  %927 = vmatpush2.msra.mxu0 0.0
  %928 = vmatprep.subr.mxu0 0.0
  %929 = vmatpush2.msra.mxu0 0.0
  %930 = vmatprep.subr.mxu0 0.0
  %931 = vmatpush2.msra.mxu0 0.0
  %932 = vmatprep.subr.mxu0 0.0
  %933 = vmatpush2.msra.mxu0 0.0
  %934 = vmatprep.subr.mxu0 0.0
  %935 = vmatpush2.msra.mxu0 0.0
  %936 = vmatprep.subr.mxu0 0.0
  %937 = vmatpush2.msra.mxu0 0.0
  %938 = vmatprep.mubr.f32.mxu0 0.0
  %v939 = vand.u32 %v586, 4294901760
  %v940 = vsub.f32 %v586, %v939
  %v941 = vand.u32 %v940, 4294901760
  %942 = vmatmul.mubr.f32.gmra.mxu0 %v941
  %v943 = vpop.f32.mrf.mxu0
  %v944 = vadd.f32 %v858, %v943
  %v945 = vpop.f32.mrf.mxu0
  %v946 = vadd.f32 %v860, %v945
  %947 = vmatprep.mubr.f32.mxu0 0.0
  %v948 = vand.u32 %v589, 4294901760
  %v949 = vsub.f32 %v589, %v948
  %v950 = vand.u32 %v949, 4294901760
  %951 = vmatmul.mubr.f32.gmra.mxu0 %v950
  %v952 = vpop.f32.mrf.mxu0
  %v953 = vadd.f32 %v866, %v952
  %v954 = vpop.f32.mrf.mxu0
  %v955 = vadd.f32 %v868, %v954
  %956 = vdwg.mxu0
  %957 = vmatprep.subr.mxu0 0.0
  %958 = vmatpush1.msra.mxu0 0.0
  %959 = vmatprep.subr.mxu0 0.0
  %960 = vmatpush1.msra.mxu0 0.0
  %961 = vmatprep.subr.mxu0 0.0
  %962 = vmatpush1.msra.mxu0 0.0
  %963 = vmatprep.subr.mxu0 0.0
  %964 = vmatpush1.msra.mxu0 0.0
  %965 = vmatprep.subr.mxu0 0.0
  %966 = vmatpush1.msra.mxu0 0.0
  %967 = vmatprep.subr.mxu0 0.0
  %968 = vmatpush1.msra.mxu0 0.0
  %969 = vmatprep.subr.mxu0 0.0
  %970 = vmatpush1.msra.mxu0 0.0
  %971 = vmatprep.subr.mxu0 0.0
  %972 = vmatpush1.msra.mxu0 0.0
  %973 = vmatprep.subr.mxu0 0.0
  %974 = vmatpush1.msra.mxu0 0.0
  %975 = vmatprep.subr.mxu0 0.0
  %976 = vmatpush1.msra.mxu0 0.0
  %977 = vmatprep.subr.mxu0 0.0
  %978 = vmatpush1.msra.mxu0 0.0
  %979 = vmatprep.subr.mxu0 0.0
  %980 = vmatpush1.msra.mxu0 0.0
  %981 = vmatprep.subr.mxu0 0.0
  %982 = vmatpush1.msra.mxu0 0.0
  %983 = vmatprep.subr.mxu0 0.0
  %984 = vmatpush1.msra.mxu0 0.0
  %v985 = vand.u32 %v584, 4294901760
  %v986 = vsub.f32 %v584, %v985
  %v987 = vand.u32 %v986, 4294901760
  %988 = vmatprep.subr.mxu0 %v987
  %v989 = vand.u32 %v583, 4294901760
  %v990 = vsub.f32 %v583, %v989
  %v991 = vand.u32 %v990, 4294901760
  %992 = vmatpush1.msra.mxu0 %v991
  %v993 = vand.u32 %v582, 4294901760
  %v994 = vsub.f32 %v582, %v993
  %v995 = vand.u32 %v994, 4294901760
  %996 = vmatprep.subr.mxu0 %v995
  %v997 = vand.u32 %v581, 4294901760
  %v998 = vsub.f32 %v581, %v997
  %v999 = vand.u32 %v998, 4294901760
  %1000 = vmatpush1.msra.mxu0 %v999
  %1001 = vmatprep.subr.mxu0 0.0
  %1002 = vmatpush2.msra.mxu0 0.0
  %1003 = vmatprep.subr.mxu0 0.0
  %1004 = vmatpush2.msra.mxu0 0.0
  %1005 = vmatprep.subr.mxu0 0.0
  %1006 = vmatpush2.msra.mxu0 0.0
  %1007 = vmatprep.subr.mxu0 0.0
  %1008 = vmatpush2.msra.mxu0 0.0
  %1009 = vmatprep.subr.mxu0 0.0
  %1010 = vmatpush2.msra.mxu0 0.0
  %1011 = vmatprep.subr.mxu0 0.0
  %1012 = vmatpush2.msra.mxu0 0.0
  %1013 = vmatprep.subr.mxu0 0.0
  %1014 = vmatpush2.msra.mxu0 0.0
  %1015 = vmatprep.subr.mxu0 0.0
  %1016 = vmatpush2.msra.mxu0 0.0
  %1017 = vmatprep.subr.mxu0 0.0
  %1018 = vmatpush2.msra.mxu0 0.0
  %1019 = vmatprep.subr.mxu0 0.0
  %1020 = vmatpush2.msra.mxu0 0.0
  %1021 = vmatprep.subr.mxu0 0.0
  %1022 = vmatpush2.msra.mxu0 0.0
  %1023 = vmatprep.subr.mxu0 0.0
  %1024 = vmatpush2.msra.mxu0 0.0
  %1025 = vmatprep.subr.mxu0 0.0
  %1026 = vmatpush2.msra.mxu0 0.0
  %1027 = vmatprep.subr.mxu0 0.0
  %1028 = vmatpush2.msra.mxu0 0.0
  %1029 = vmatprep.subr.mxu0 0.0
  %1030 = vmatpush2.msra.mxu0 0.0
  %1031 = vmatprep.subr.mxu0 0.0
  %1032 = vmatpush2.msra.mxu0 0.0
  %1033 = vmatprep.mubr.f32.mxu0 0.0
  %v1034 = vand.u32 %v586, 4294901760
  %1035 = vmatmul.mubr.f32.gmra.mxu0 %v1034
  %v1036 = vpop.f32.mrf.mxu0
  %v1037 = vadd.f32 %v944, %v1036
  %v1038 = vpop.f32.mrf.mxu0
  %v1039 = vadd.f32 %v946, %v1038
  %1040 = vmatprep.mubr.f32.mxu0 0.0
  %v1041 = vand.u32 %v589, 4294901760
  %1042 = vmatmul.mubr.f32.gmra.mxu0 %v1041
  %v1043 = vpop.f32.mrf.mxu0
  %v1044 = vadd.f32 %v953, %v1043
  %v1045 = vpop.f32.mrf.mxu0
  %v1046 = vadd.f32 %v955, %v1045
  %1047 = vdwg.mxu0
  %1048 = vmatprep.subr.mxu0 0.0
  %1049 = vmatpush1.msra.mxu0 0.0
  %1050 = vmatprep.subr.mxu0 0.0
  %1051 = vmatpush1.msra.mxu0 0.0
  %1052 = vmatprep.subr.mxu0 0.0
  %1053 = vmatpush1.msra.mxu0 0.0
  %1054 = vmatprep.subr.mxu0 0.0
  %1055 = vmatpush1.msra.mxu0 0.0
  %1056 = vmatprep.subr.mxu0 0.0
  %1057 = vmatpush1.msra.mxu0 0.0
  %1058 = vmatprep.subr.mxu0 0.0
  %1059 = vmatpush1.msra.mxu0 0.0
  %1060 = vmatprep.subr.mxu0 0.0
  %1061 = vmatpush1.msra.mxu0 0.0
  %1062 = vmatprep.subr.mxu0 0.0
  %1063 = vmatpush1.msra.mxu0 0.0
  %1064 = vmatprep.subr.mxu0 0.0
  %1065 = vmatpush1.msra.mxu0 0.0
  %1066 = vmatprep.subr.mxu0 0.0
  %1067 = vmatpush1.msra.mxu0 0.0
  %1068 = vmatprep.subr.mxu0 0.0
  %1069 = vmatpush1.msra.mxu0 0.0
  %1070 = vmatprep.subr.mxu0 0.0
  %1071 = vmatpush1.msra.mxu0 0.0
  %1072 = vmatprep.subr.mxu0 0.0
  %1073 = vmatpush1.msra.mxu0 0.0
  %1074 = vmatprep.subr.mxu0 0.0
  %1075 = vmatpush1.msra.mxu0 0.0
  %v1076 = vand.u32 %v584, 4294901760
  %1077 = vmatprep.subr.mxu0 %v1076
  %v1078 = vand.u32 %v583, 4294901760
  %1079 = vmatpush1.msra.mxu0 %v1078
  %v1080 = vand.u32 %v582, 4294901760
  %1081 = vmatprep.subr.mxu0 %v1080
  %v1082 = vand.u32 %v581, 4294901760
  %1083 = vmatpush1.msra.mxu0 %v1082
  %1084 = vmatprep.subr.mxu0 0.0
  %1085 = vmatpush2.msra.mxu0 0.0
  %1086 = vmatprep.subr.mxu0 0.0
  %1087 = vmatpush2.msra.mxu0 0.0
  %1088 = vmatprep.subr.mxu0 0.0
  %1089 = vmatpush2.msra.mxu0 0.0
  %1090 = vmatprep.subr.mxu0 0.0
  %1091 = vmatpush2.msra.mxu0 0.0
  %1092 = vmatprep.subr.mxu0 0.0
  %1093 = vmatpush2.msra.mxu0 0.0
  %1094 = vmatprep.subr.mxu0 0.0
  %1095 = vmatpush2.msra.mxu0 0.0
  %1096 = vmatprep.subr.mxu0 0.0
  %1097 = vmatpush2.msra.mxu0 0.0
  %1098 = vmatprep.subr.mxu0 0.0
  %1099 = vmatpush2.msra.mxu0 0.0
  %1100 = vmatprep.subr.mxu0 0.0
  %1101 = vmatpush2.msra.mxu0 0.0
  %1102 = vmatprep.subr.mxu0 0.0
  %1103 = vmatpush2.msra.mxu0 0.0
  %1104 = vmatprep.subr.mxu0 0.0
  %1105 = vmatpush2.msra.mxu0 0.0
  %1106 = vmatprep.subr.mxu0 0.0
  %1107 = vmatpush2.msra.mxu0 0.0
  %1108 = vmatprep.subr.mxu0 0.0
  %1109 = vmatpush2.msra.mxu0 0.0
  %1110 = vmatprep.subr.mxu0 0.0
  %1111 = vmatpush2.msra.mxu0 0.0
  %1112 = vmatprep.subr.mxu0 0.0
  %1113 = vmatpush2.msra.mxu0 0.0
  %1114 = vmatprep.subr.mxu0 0.0
  %1115 = vmatpush2.msra.mxu0 0.0
  %1116 = vmatprep.mubr.f32.mxu0 0.0
  %v1117 = vand.u32 %v586, 4294901760
  %1118 = vmatmul.mubr.f32.gmra.mxu0 %v1117
  %v1119 = vpop.f32.mrf.mxu0
  %v1120 = vadd.f32 %v1037, %v1119
  %v1121 = vpop.f32.mrf.mxu0
  %v1122 = vadd.f32 %v1039, %v1121
  %1123 = vmatprep.mubr.f32.mxu0 0.0
  %v1124 = vand.u32 %v589, 4294901760
  %1125 = vmatmul.mubr.f32.gmra.mxu0 %v1124
  %v1126 = vpop.f32.mrf.mxu0
  %v1127 = vadd.f32 %v1044, %v1126
  %v1128 = vpop.f32.mrf.mxu0
  %v1129 = vadd.f32 %v1046, %v1128
  %1130 = vdwg.mxu0
  %v1131 = vmul.f32 %v570, %v1120
  %v1132 = vmul.f32 %v572, %v1122
  %v1133 = vmul.f32 %v577, %v1127
  %v1134 = vmul.f32 %v579, %v1129
  %1135 = vst [vmem:[%s3] sm:$0xff] %v1131
  %1136 = vst [vmem:[%s3 + $0x8] sm:$0xff] %v1132
  %1137 = vst [vmem:[%s3 + $0x10] sm:$0xff] %v1133
  %1138 = vst [vmem:[%s3 + $0x18] sm:$0xff] %v1134
  // Predicated region
  $region14: #{density_forward.1} parent=0 // pred_check
    _
  $region15: #{density_forward.1} parent=0 // pred_check_branch
    %1140 = sbr.rel (0) target = $region17
  $region16: #{density_forward.1} parent=0 // pred_region
    _
  $region17: #{density_forward.1} parent=0 // pred_fallthru
    _
  // Predicated region
  $region18: #{density_forward.1} parent=0 // pred_check
    _
  $region19: #{density_forward.1} parent=0 // pred_check_branch
    %1142 = sbr.rel (0) target = $region21
  $region20: #{density_forward.1} parent=0 // pred_region
    _
  $region21: #{density_forward.1} parent=0 // pred_fallthru
    _

</llo_original>
